<compile_context>
chip_gen: v6e
topology: v6e:2x2x1
jax: 0.10.0
libtpu: 0.0.40
codegen_flags: <defaults>
</compile_context>

<pallas_src>
import jax
import jax.numpy as jnp
from jax.experimental import pallas as pl
from jax.experimental.pallas import tpu as pltpu

# ----------------------------- config ---------------------------------------
BATCH = 2
CHANNELS = 3
IMG = 28              # small stand-in for EVA-02's 448x448 input
PATCH = 14            # EVA-02 base uses patch 14
FEATURE_DIM = 256     # small stand-in for EVA-02 base num_features (=768); 128-multiple
HIDDEN = 64           # from nn.Linear(feature_dim, 64)
HIDDEN_PAD = 128      # lane-dense padded hidden width
NUM_CLASSES = 2
CLS_PAD = 128         # lane-dense padded output width (sliced back to NUM_CLASSES)
SUBLANE = 8           # f32 sublane count of one vreg

PATCH_DIM = CHANNELS * PATCH * PATCH                     # 588
PATCH_DIM_PAD = 128 * ((PATCH_DIM + 127) // 128)         # 640 = 5*128


def _round_up(n, m):
    return m * ((n + m - 1) // m)


# ----------------------------- kernel ---------------------------------------
def spoof_classifier_kernel(patches_ref, we_ref, be_ref,
                            w1_ref, b1_ref, w2_ref, b2_ref, out_ref):
    # Backbone stand-in: mean-pool the patches FIRST (commutes with the linear
    # patch embedding), then one small 2-D MXU dot instead of a batched
    # per-patch einsum.  feats == mean_n(patches @ we + be) exactly.
    # The axis=1 reduction runs on the XLU slot; the dots run on the MXU.
    mean_patch = jnp.mean(patches_ref[...], axis=1)                   # (Bp, Kpad)
    feats = jnp.dot(mean_patch, we_ref[...],
                    preferred_element_type=jnp.float32) + be_ref[...]  # (Bp, D)

    # Classifier head: Linear(D,64) -> ReLU -> Linear(64,2) -> Sigmoid.
    # Hidden / class dims are zero-padded to 128 lanes; padded hidden columns
    # are relu(0)=0 and feed zero rows of w2, padded logits are sliced off
    # by the wrapper, so results are bit-equivalent to the unpadded head.
    h = jnp.dot(feats, w1_ref[...], preferred_element_type=jnp.float32)
    h = jnp.maximum(h + b1_ref[...], 0.0)                             # (Bp, 128)
    logits = jnp.dot(h, w2_ref[...], preferred_element_type=jnp.float32)
    logits = logits + b2_ref[...]                                     # (Bp, 128)
    out_ref[...] = jax.nn.sigmoid(logits)


# ----------------------------- wrapper ---------------------------------------
def spoof_classifier(x, padded_params):
    """x: [B, C, H, W] float32 (NCHW). Returns [B, NUM_CLASSES] probabilities."""
    B, C, H, W = x.shape
    p = PATCH
    nh, nw = H // p, W // p
    n_patches = nh * nw
    b_pad = _round_up(max(B, SUBLANE), SUBLANE)        # sublane-full batch rows

    # im2col patch extraction (glue): [Bp, N, C*p*p]; batch padded to a sublane
    # multiple and K padded to a lane multiple so every kernel load is unmasked.
    patches = (x.reshape(B, C, nh, p, nw, p)
                 .transpose(0, 2, 4, 1, 3, 5)
                 .reshape(B, n_patches, C * p * p))
    patches = jnp.pad(
        patches,
        ((0, b_pad - B), (0, 0), (0, PATCH_DIM_PAD - PATCH_DIM)))

    we, be, w1, b1, w2, b2 = padded_params
    vmem = pl.BlockSpec(memory_space=pltpu.MemorySpace.VMEM)

    # Advisory cost hint for XLA's scheduler around the custom call.
    flops = 2 * b_pad * (PATCH_DIM_PAD * FEATURE_DIM
                         + FEATURE_DIM * HIDDEN_PAD
                         + HIDDEN_PAD * CLS_PAD)
    bytes_accessed = 4 * (patches.size + we.size + be.size + w1.size
                          + b1.size + w2.size + b2.size + b_pad * CLS_PAD)
    cost = pl.CostEstimate(flops=flops,
                           transcendentals=b_pad * CLS_PAD,   # sigmoid exp (EUP)
                           bytes_accessed=bytes_accessed)

    out = pl.pallas_call(
        spoof_classifier_kernel,
        out_shape=jax.ShapeDtypeStruct((b_pad, CLS_PAD), jnp.float32),
        in_specs=[vmem] * 7,
        out_specs=vmem,
        cost_estimate=cost,
    )(patches, we, be, w1, b1, w2, b2)
    return out[:B, :NUM_CLASSES]


# ----------------------------- params ----------------------------------------
def init_params(key):
    """Unpadded parameters (used by the pure-JAX reference)."""
    k0, k1, k2, k3, k4, k5 = jax.random.split(key, 6)
    we = jax.random.normal(k0, (PATCH_DIM, FEATURE_DIM), jnp.float32) * 0.02
    be = jax.random.normal(k1, (1, FEATURE_DIM), jnp.float32) * 0.02
    lim1 = 1.0 / jnp.sqrt(FEATURE_DIM)
    w1 = jax.random.uniform(k2, (FEATURE_DIM, HIDDEN), jnp.float32, -lim1, lim1)
    b1 = jax.random.uniform(k3, (1, HIDDEN), jnp.float32, -lim1, lim1)
    lim2 = 1.0 / jnp.sqrt(HIDDEN)
    w2 = jax.random.uniform(k4, (HIDDEN, NUM_CLASSES), jnp.float32, -lim2, lim2)
    b2 = jax.random.uniform(k5, (1, NUM_CLASSES), jnp.float32, -lim2, lim2)
    return we, be, w1, b1, w2, b2


def pad_params(params):
    """One-time zero-padding of weights to lane/MXU-friendly shapes."""
    we, be, w1, b1, w2, b2 = params
    we_p = jnp.pad(we, ((0, PATCH_DIM_PAD - PATCH_DIM), (0, 0)))       # (640, 256)
    w1_p = jnp.pad(w1, ((0, 0), (0, HIDDEN_PAD - HIDDEN)))             # (256, 128)
    b1_p = jnp.pad(b1, ((0, 0), (0, HIDDEN_PAD - HIDDEN)))             # (1, 128)
    w2_p = jnp.pad(w2, ((0, HIDDEN_PAD - HIDDEN), (0, CLS_PAD - NUM_CLASSES)))  # (128, 128)
    b2_p = jnp.pad(b2, ((0, 0), (0, CLS_PAD - NUM_CLASSES)))           # (1, 128)
    return we_p, be, w1_p, b1_p, w2_p, b2_p


def reference_forward(x, params):
    """Pure-JAX reference of the same forward pass (original op order)."""
    we, be, w1, b1, w2, b2 = params
    B, C, H, W = x.shape
    p = PATCH
    nh, nw = H // p, W // p
    patches = (x.reshape(B, C, nh, p, nw, p)
                 .transpose(0, 2, 4, 1, 3, 5)
                 .reshape(B, nh * nw, C * p * p))
    feats = jnp.mean(jnp.einsum('bnp,pd->bnd', patches, we) + be, axis=1)
    h = jnp.maximum(feats @ w1 + b1, 0.0)
    return jax.nn.sigmoid(h @ w2 + b2)


# ----------------------------- main -------------------------------------------
if __name__ == "__main__":
    key = jax.random.PRNGKey(0)
    kx, kp = jax.random.split(key)
    x = jax.random.normal(kx, (BATCH, CHANNELS, IMG, IMG), jnp.float32)
    params = init_params(kp)
    padded_params = pad_params(params)   # done once, reused across calls

    fwd = jax.jit(lambda xx: spoof_classifier(xx, padded_params))
    out = jax.block_until_ready(fwd(x))

    ref = reference_forward(x, params)
    assert out.shape == (BATCH, NUM_CLASSES), out.shape
    assert jnp.allclose(out, ref, atol=1e-5, rtol=1e-5), (out, ref)

    print("KERNEL_OK")
</pallas_src>

<mosaic_0001>
module attributes {stable_mosaic.version = 11 : i64} {
  func.func @spoof_classifier_kernel(%arg0: memref<8x4x640xf32, #tpu.memory_space<vmem>>, %arg1: memref<640x256xf32, #tpu.memory_space<vmem>>, %arg2: memref<1x256xf32, #tpu.memory_space<vmem>>, %arg3: memref<256x128xf32, #tpu.memory_space<vmem>>, %arg4: memref<1x128xf32, #tpu.memory_space<vmem>>, %arg5: memref<128x128xf32, #tpu.memory_space<vmem>>, %arg6: memref<1x128xf32, #tpu.memory_space<vmem>>, %arg7: memref<8x128xf32, #tpu.memory_space<vmem>>) attributes {dimension_semantics = [], scalar_prefetch = 0 : i64, scratch_operands = 0 : i64, tpu.core_type = #tpu.core_type<tc>} {
    %c0 = arith.constant 0 : index
    %c0_0 = arith.constant 0 : index
    %c0_1 = arith.constant 0 : index
    %0 = vector.load %arg0[%c0, %c0_0, %c0_1] : memref<8x4x640xf32, #tpu.memory_space<vmem>>, vector<8x4x640xf32>
    %cst = arith.constant dense<0.000000e+00> : vector<8x640xf32>
    %1 = vector.multi_reduction <add>, %0, %cst [1] : vector<8x4x640xf32> to vector<8x640xf32>
    %cst_2 = arith.constant 4.000000e+00 : f32
    %2 = vector.broadcast %cst_2 : f32 to vector<8x640xf32>
    %3 = arith.divf %1, %2 : vector<8x640xf32>
    %c0_3 = arith.constant 0 : index
    %c0_4 = arith.constant 0 : index
    %4 = vector.load %arg1[%c0_3, %c0_4] : memref<640x256xf32, #tpu.memory_space<vmem>>, vector<640x256xf32>
    %cst_5 = arith.constant dense<0.000000e+00> : vector<8x256xf32>
    %5 = tpu.matmul %3, %4, %cst_5 {dimension_numbers = #tpu.dot_dimension_numbers<[1], [0], [0], [1], [0, 0, 1, 1], [], []>} : vector<8x640xf32>, vector<640x256xf32>, vector<8x256xf32> -> vector<8x256xf32>
    %c0_6 = arith.constant 0 : index
    %c0_7 = arith.constant 0 : index
    %6 = vector.load %arg2[%c0_6, %c0_7] : memref<1x256xf32, #tpu.memory_space<vmem>>, vector<1x256xf32>
    %7 = vector.broadcast %6 : vector<1x256xf32> to vector<8x256xf32>
    %8 = arith.addf %5, %7 : vector<8x256xf32>
    %c0_8 = arith.constant 0 : index
    %c0_9 = arith.constant 0 : index
    %9 = vector.load %arg3[%c0_8, %c0_9] : memref<256x128xf32, #tpu.memory_space<vmem>>, vector<256x128xf32>
    %cst_10 = arith.constant dense<0.000000e+00> : vector<8x128xf32>
    %10 = tpu.matmul %8, %9, %cst_10 {dimension_numbers = #tpu.dot_dimension_numbers<[1], [0], [0], [1], [0, 0, 1, 1], [], []>} : vector<8x256xf32>, vector<256x128xf32>, vector<8x128xf32> -> vector<8x128xf32>
    %c0_11 = arith.constant 0 : index
    %c0_12 = arith.constant 0 : index
    %11 = vector.load %arg4[%c0_11, %c0_12] : memref<1x128xf32, #tpu.memory_space<vmem>>, vector<1x128xf32>
    %12 = vector.broadcast %11 : vector<1x128xf32> to vector<8x128xf32>
    %13 = arith.addf %10, %12 : vector<8x128xf32>
    %cst_13 = arith.constant 0.000000e+00 : f32
    %14 = vector.broadcast %cst_13 : f32 to vector<8x128xf32>
    %15 = arith.maximumf %13, %14 : vector<8x128xf32>
    %c0_14 = arith.constant 0 : index
    %c0_15 = arith.constant 0 : index
    %16 = vector.load %arg5[%c0_14, %c0_15] : memref<128x128xf32, #tpu.memory_space<vmem>>, vector<128x128xf32>
    %cst_16 = arith.constant dense<0.000000e+00> : vector<8x128xf32>
    %17 = tpu.matmul %15, %16, %cst_16 {dimension_numbers = #tpu.dot_dimension_numbers<[1], [0], [0], [1], [0, 0, 1, 1], [], []>} : vector<8x128xf32>, vector<128x128xf32>, vector<8x128xf32> -> vector<8x128xf32>
    %c0_17 = arith.constant 0 : index
    %c0_18 = arith.constant 0 : index
    %18 = vector.load %arg6[%c0_17, %c0_18] : memref<1x128xf32, #tpu.memory_space<vmem>>, vector<1x128xf32>
    %19 = vector.broadcast %18 : vector<1x128xf32> to vector<8x128xf32>
    %20 = arith.addf %17, %19 : vector<8x128xf32>
    %21 = arith.negf %20 : vector<8x128xf32>
    %22 = math.exp %21 : vector<8x128xf32>
    %cst_19 = arith.constant 1.000000e+00 : f32
    %23 = vector.broadcast %cst_19 : f32 to vector<8x128xf32>
    %24 = arith.addf %23, %22 : vector<8x128xf32>
    %25 = arith.divf %23, %24 : vector<8x128xf32>
    %c0_20 = arith.constant 0 : index
    %c0_21 = arith.constant 0 : index
    %26 = vector.load %arg7[%c0_20, %c0_21] : memref<8x128xf32, #tpu.memory_space<vmem>>, vector<8x128xf32>
    tpu.vector_store %arg7[%c0_20, %c0_21], %25 {strides = array<i32>} : memref<8x128xf32, #tpu.memory_space<vmem>>, vector<8x128xf32>,
    return
  }
}

</mosaic_0001>

<llo_original>
// kernel: _lambda_.1
$region0: #{_lambda_.1}
  #allocation0 [shape = 'u32[]', space=smem, size = 0x4, offset = 0x4, fixed_abs, tag = 'smem constant byte address 0x4 - core index']
  #allocation1 [shape = 'u32[144,128]{1,0:T(1,128)}', space=vmem, size = 0x12000, scoped, tag = 'internal scratch']
  %s0 = inlined_call_operand.vmem [shape: f32[8,4,640], index: 0, kind: input, shape index: {}]
  %s1 = inlined_call_operand.vmem [shape: f32[640,256], index: 1, kind: input, shape index: {}]
  %s2 = inlined_call_operand.vmem [shape: f32[1,256], index: 2, kind: input, shape index: {}]
  %s3 = inlined_call_operand.vmem [shape: f32[256,128], index: 3, kind: input, shape index: {}]
  %s4 = inlined_call_operand.vmem [shape: f32[1,128], index: 4, kind: input, shape index: {}]
  %s5 = inlined_call_operand.vmem [shape: f32[128,128], index: 5, kind: input, shape index: {}]
  %s6 = inlined_call_operand.vmem [shape: f32[1,128], index: 6, kind: input, shape index: {}]
  %s7 = inlined_call_operand.vmem [shape: f32[8,128], index: 7, kind: output, shape index: {}]
  %s8 = sld [smem:[#allocation0]]
  $region38: #{_lambda_.1} parent=0
    _
  %s10 = ssub.s32 1, %s8
  %s11 = scalar_select 0, %s10, %s8
  // Predicated region
  $region2: #{_lambda_.1} parent=0 // pred_check
    _
  $region3: #{_lambda_.1} parent=0 // pred_check_branch
    %13 = sbr.rel (0) target = $region5
  $region4: #{_lambda_.1} parent=0 // pred_region
    _
  $region5: #{_lambda_.1} parent=0 // pred_fallthru
    _
  // Predicated region
  $region6: #{_lambda_.1} parent=0 // pred_check
    _
  $region7: #{_lambda_.1} parent=0 // pred_check_branch
    %15 = sbr.rel (0) target = $region9
  $region8: #{_lambda_.1} parent=0 // pred_region
    _
  $region9: #{_lambda_.1} parent=0 // pred_fallthru
    _
  // Predicated region
  $region10: #{_lambda_.1} parent=0 // pred_check
    _
  $region11: #{_lambda_.1} parent=0 // pred_check_branch
    %17 = sbr.rel (0) target = $region13
  $region12: #{_lambda_.1} parent=0 // pred_region
    _
  $region13: #{_lambda_.1} parent=0 // pred_fallthru
    _
  // Predicated region
  $region14: #{_lambda_.1} parent=0 // pred_check
    _
  $region15: #{_lambda_.1} parent=0 // pred_check_branch
    %19 = sbr.rel (0) target = $region17
  $region16: #{_lambda_.1} parent=0 // pred_region
    _
  $region17: #{_lambda_.1} parent=0 // pred_fallthru
    _
  // Predicated region
  $region18: #{_lambda_.1} parent=0 // pred_check
    _
  $region19: #{_lambda_.1} parent=0 // pred_check_branch
    %21 = sbr.rel (0) target = $region21
  $region20: #{_lambda_.1} parent=0 // pred_region
    _
  $region21: #{_lambda_.1} parent=0 // pred_fallthru
    _
  // Predicated region
  $region22: #{_lambda_.1} parent=0 // pred_check
    _
  $region23: #{_lambda_.1} parent=0 // pred_check_branch
    %23 = sbr.rel (0) target = $region25
  $region24: #{_lambda_.1} parent=0 // pred_region
    _
  $region25: #{_lambda_.1} parent=0 // pred_fallthru
    _
  // Predicated region
  $region26: #{_lambda_.1} parent=0 // pred_check
    _
  $region27: #{_lambda_.1} parent=0 // pred_check_branch
    %25 = sbr.rel (0) target = $region29
  $region28: #{_lambda_.1} parent=0 // pred_region
    _
  $region29: #{_lambda_.1} parent=0 // pred_fallthru
    _
  %v26 = vld [vmem:[%s0] sm:$0xff]
  %v27 = vld [vmem:[%s0 + $0x8] sm:$0xff]
  %v28 = vld [vmem:[%s0 + $0x10] sm:$0xf]
  %v29 = vld [vmem:[%s0 + $0x14] sm:$0xff]
  %v30 = vld [vmem:[%s0 + $0x1c] sm:$0xff]
  %v31 = vld [vmem:[%s0 + $0x24] sm:$0xf]
  %v32 = vld [vmem:[%s0 + $0x28] sm:$0xff]
  %v33 = vld [vmem:[%s0 + $0x30] sm:$0xff]
  %v34 = vld [vmem:[%s0 + $0x38] sm:$0xf]
  %v35 = vld [vmem:[%s0 + $0x3c] sm:$0xff]
  %v36 = vld [vmem:[%s0 + $0x44] sm:$0xff]
  %v37 = vld [vmem:[%s0 + $0x4c] sm:$0xf]
  %v38 = vld [vmem:[%s0 + $0x50] sm:$0xff]
  %v39 = vld [vmem:[%s0 + $0x58] sm:$0xff]
  %v40 = vld [vmem:[%s0 + $0x60] sm:$0xf]
  %v41 = vld [vmem:[%s0 + $0x64] sm:$0xff]
  %v42 = vld [vmem:[%s0 + $0x6c] sm:$0xff]
  %v43 = vld [vmem:[%s0 + $0x74] sm:$0xf]
  %v44 = vld [vmem:[%s0 + $0x78] sm:$0xff]
  %v45 = vld [vmem:[%s0 + $0x80] sm:$0xff]
  %v46 = vld [vmem:[%s0 + $0x88] sm:$0xf]
  %v47 = vld [vmem:[%s0 + $0x8c] sm:$0xff]
  %v48 = vld [vmem:[%s0 + $0x94] sm:$0xff]
  %v49 = vld [vmem:[%s0 + $0x9c] sm:$0xf]
  %v66 = vcombine.high %v26, %v26
  %v67 = vcombine.high %v27, %v27
  %v68 = vcombine.high %v29, %v29
  %v69 = vcombine.high %v30, %v30
  %v70 = vcombine.high %v32, %v32
  %v71 = vcombine.high %v33, %v33
  %v72 = vcombine.high %v35, %v35
  %v73 = vcombine.high %v36, %v36
  %v74 = vcombine.high %v38, %v38
  %v75 = vcombine.high %v39, %v39
  %v76 = vcombine.high %v41, %v41
  %v77 = vcombine.high %v42, %v42
  %v78 = vcombine.high %v44, %v44
  %v79 = vcombine.high %v45, %v45
  %v80 = vcombine.high %v47, %v47
  %v81 = vcombine.high %v48, %v48
  %vm98 = vcmask 1043456
  %v99 = vsel %vm98, %v26, 0.0
  %v100 = vrot.slane %v99, 4
  %v101 = vadd.f32 %v99, %v100
  %v102 = vrot.slane %v101, 2
  %v103 = vadd.f32 %v101, %v102
  %v104 = vrot.slane %v103, 1
  %v105 = vadd.f32 %v103, %v104
  %v106 = vsel %vm98, %v66, 0.0
  %v107 = vrot.slane %v106, 4
  %v108 = vadd.f32 %v106, %v107
  %v109 = vrot.slane %v108, 2
  %v110 = vadd.f32 %v108, %v109
  %v111 = vrot.slane %v110, 1
  %v112 = vadd.f32 %v110, %v111
  %v113 = vsel %vm98, %v27, 0.0
  %v114 = vrot.slane %v113, 4
  %v115 = vadd.f32 %v113, %v114
  %v116 = vrot.slane %v115, 2
  %v117 = vadd.f32 %v115, %v116
  %v118 = vrot.slane %v117, 1
  %v119 = vadd.f32 %v117, %v118
  %v120 = vsel %vm98, %v67, 0.0
  %v121 = vrot.slane %v120, 4
  %v122 = vadd.f32 %v120, %v121
  %v123 = vrot.slane %v122, 2
  %v124 = vadd.f32 %v122, %v123
  %v125 = vrot.slane %v124, 1
  %v126 = vadd.f32 %v124, %v125
  %v127 = vsel %vm98, %v28, 0.0
  %v128 = vrot.slane %v127, 4
  %v129 = vadd.f32 %v127, %v128
  %v130 = vrot.slane %v129, 2
  %v131 = vadd.f32 %v129, %v130
  %v132 = vrot.slane %v131, 1
  %v133 = vadd.f32 %v131, %v132
  %v134 = vsel %vm98, %v29, 0.0
  %v135 = vrot.slane %v134, 4
  %v136 = vadd.f32 %v134, %v135
  %v137 = vrot.slane %v136, 2
  %v138 = vadd.f32 %v136, %v137
  %v139 = vrot.slane %v138, 1
  %v140 = vadd.f32 %v138, %v139
  %v141 = vsel %vm98, %v68, 0.0
  %v142 = vrot.slane %v141, 4
  %v143 = vadd.f32 %v141, %v142
  %v144 = vrot.slane %v143, 2
  %v145 = vadd.f32 %v143, %v144
  %v146 = vrot.slane %v145, 1
  %v147 = vadd.f32 %v145, %v146
  %v148 = vsel %vm98, %v30, 0.0
  %v149 = vrot.slane %v148, 4
  %v150 = vadd.f32 %v148, %v149
  %v151 = vrot.slane %v150, 2
  %v152 = vadd.f32 %v150, %v151
  %v153 = vrot.slane %v152, 1
  %v154 = vadd.f32 %v152, %v153
  %v155 = vsel %vm98, %v69, 0.0
  %v156 = vrot.slane %v155, 4
  %v157 = vadd.f32 %v155, %v156
  %v158 = vrot.slane %v157, 2
  %v159 = vadd.f32 %v157, %v158
  %v160 = vrot.slane %v159, 1
  %v161 = vadd.f32 %v159, %v160
  %v162 = vsel %vm98, %v31, 0.0
  %v163 = vrot.slane %v162, 4
  %v164 = vadd.f32 %v162, %v163
  %v165 = vrot.slane %v164, 2
  %v166 = vadd.f32 %v164, %v165
  %v167 = vrot.slane %v166, 1
  %v168 = vadd.f32 %v166, %v167
  %v169 = vsel %vm98, %v32, 0.0
  %v170 = vrot.slane %v169, 4
  %v171 = vadd.f32 %v169, %v170
  %v172 = vrot.slane %v171, 2
  %v173 = vadd.f32 %v171, %v172
  %v174 = vrot.slane %v173, 1
  %v175 = vadd.f32 %v173, %v174
  %v176 = vsel %vm98, %v70, 0.0
  %v177 = vrot.slane %v176, 4
  %v178 = vadd.f32 %v176, %v177
  %v179 = vrot.slane %v178, 2
  %v180 = vadd.f32 %v178, %v179
  %v181 = vrot.slane %v180, 1
  %v182 = vadd.f32 %v180, %v181
  %v183 = vsel %vm98, %v33, 0.0
  %v184 = vrot.slane %v183, 4
  %v185 = vadd.f32 %v183, %v184
  %v186 = vrot.slane %v185, 2
  %v187 = vadd.f32 %v185, %v186
  %v188 = vrot.slane %v187, 1
  %v189 = vadd.f32 %v187, %v188
  %v190 = vsel %vm98, %v71, 0.0
  %v191 = vrot.slane %v190, 4
  %v192 = vadd.f32 %v190, %v191
  %v193 = vrot.slane %v192, 2
  %v194 = vadd.f32 %v192, %v193
  %v195 = vrot.slane %v194, 1
  %v196 = vadd.f32 %v194, %v195
  %v197 = vsel %vm98, %v34, 0.0
  %v198 = vrot.slane %v197, 4
  %v199 = vadd.f32 %v197, %v198
  %v200 = vrot.slane %v199, 2
  %v201 = vadd.f32 %v199, %v200
  %v202 = vrot.slane %v201, 1
  %v203 = vadd.f32 %v201, %v202
  %v204 = vsel %vm98, %v35, 0.0
  %v205 = vrot.slane %v204, 4
  %v206 = vadd.f32 %v204, %v205
  %v207 = vrot.slane %v206, 2
  %v208 = vadd.f32 %v206, %v207
  %v209 = vrot.slane %v208, 1
  %v210 = vadd.f32 %v208, %v209
  %v211 = vsel %vm98, %v72, 0.0
  %v212 = vrot.slane %v211, 4
  %v213 = vadd.f32 %v211, %v212
  %v214 = vrot.slane %v213, 2
  %v215 = vadd.f32 %v213, %v214
  %v216 = vrot.slane %v215, 1
  %v217 = vadd.f32 %v215, %v216
  %v218 = vsel %vm98, %v36, 0.0
  %v219 = vrot.slane %v218, 4
  %v220 = vadd.f32 %v218, %v219
  %v221 = vrot.slane %v220, 2
  %v222 = vadd.f32 %v220, %v221
  %v223 = vrot.slane %v222, 1
  %v224 = vadd.f32 %v222, %v223
  %v225 = vsel %vm98, %v73, 0.0
  %v226 = vrot.slane %v225, 4
  %v227 = vadd.f32 %v225, %v226
  %v228 = vrot.slane %v227, 2
  %v229 = vadd.f32 %v227, %v228
  %v230 = vrot.slane %v229, 1
  %v231 = vadd.f32 %v229, %v230
  %v232 = vsel %vm98, %v37, 0.0
  %v233 = vrot.slane %v232, 4
  %v234 = vadd.f32 %v232, %v233
  %v235 = vrot.slane %v234, 2
  %v236 = vadd.f32 %v234, %v235
  %v237 = vrot.slane %v236, 1
  %v238 = vadd.f32 %v236, %v237
  %v239 = vsel %vm98, %v38, 0.0
  %v240 = vrot.slane %v239, 4
  %v241 = vadd.f32 %v239, %v240
  %v242 = vrot.slane %v241, 2
  %v243 = vadd.f32 %v241, %v242
  %v244 = vrot.slane %v243, 1
  %v245 = vadd.f32 %v243, %v244
  %v246 = vsel %vm98, %v74, 0.0
  %v247 = vrot.slane %v246, 4
  %v248 = vadd.f32 %v246, %v247
  %v249 = vrot.slane %v248, 2
  %v250 = vadd.f32 %v248, %v249
  %v251 = vrot.slane %v250, 1
  %v252 = vadd.f32 %v250, %v251
  %v253 = vsel %vm98, %v39, 0.0
  %v254 = vrot.slane %v253, 4
  %v255 = vadd.f32 %v253, %v254
  %v256 = vrot.slane %v255, 2
  %v257 = vadd.f32 %v255, %v256
  %v258 = vrot.slane %v257, 1
  %v259 = vadd.f32 %v257, %v258
  %v260 = vsel %vm98, %v75, 0.0
  %v261 = vrot.slane %v260, 4
  %v262 = vadd.f32 %v260, %v261
  %v263 = vrot.slane %v262, 2
  %v264 = vadd.f32 %v262, %v263
  %v265 = vrot.slane %v264, 1
  %v266 = vadd.f32 %v264, %v265
  %v267 = vsel %vm98, %v40, 0.0
  %v268 = vrot.slane %v267, 4
  %v269 = vadd.f32 %v267, %v268
  %v270 = vrot.slane %v269, 2
  %v271 = vadd.f32 %v269, %v270
  %v272 = vrot.slane %v271, 1
  %v273 = vadd.f32 %v271, %v272
  %v274 = vsel %vm98, %v41, 0.0
  %v275 = vrot.slane %v274, 4
  %v276 = vadd.f32 %v274, %v275
  %v277 = vrot.slane %v276, 2
  %v278 = vadd.f32 %v276, %v277
  %v279 = vrot.slane %v278, 1
  %v280 = vadd.f32 %v278, %v279
  %v281 = vsel %vm98, %v76, 0.0
  %v282 = vrot.slane %v281, 4
  %v283 = vadd.f32 %v281, %v282
  %v284 = vrot.slane %v283, 2
  %v285 = vadd.f32 %v283, %v284
  %v286 = vrot.slane %v285, 1
  %v287 = vadd.f32 %v285, %v286
  %v288 = vsel %vm98, %v42, 0.0
  %v289 = vrot.slane %v288, 4
  %v290 = vadd.f32 %v288, %v289
  %v291 = vrot.slane %v290, 2
  %v292 = vadd.f32 %v290, %v291
  %v293 = vrot.slane %v292, 1
  %v294 = vadd.f32 %v292, %v293
  %v295 = vsel %vm98, %v77, 0.0
  %v296 = vrot.slane %v295, 4
  %v297 = vadd.f32 %v295, %v296
  %v298 = vrot.slane %v297, 2
  %v299 = vadd.f32 %v297, %v298
  %v300 = vrot.slane %v299, 1
  %v301 = vadd.f32 %v299, %v300
  %v302 = vsel %vm98, %v43, 0.0
  %v303 = vrot.slane %v302, 4
  %v304 = vadd.f32 %v302, %v303
  %v305 = vrot.slane %v304, 2
  %v306 = vadd.f32 %v304, %v305
  %v307 = vrot.slane %v306, 1
  %v308 = vadd.f32 %v306, %v307
  %v309 = vsel %vm98, %v44, 0.0
  %v310 = vrot.slane %v309, 4
  %v311 = vadd.f32 %v309, %v310
  %v312 = vrot.slane %v311, 2
  %v313 = vadd.f32 %v311, %v312
  %v314 = vrot.slane %v313, 1
  %v315 = vadd.f32 %v313, %v314
  %v316 = vsel %vm98, %v78, 0.0
  %v317 = vrot.slane %v316, 4
  %v318 = vadd.f32 %v316, %v317
  %v319 = vrot.slane %v318, 2
  %v320 = vadd.f32 %v318, %v319
  %v321 = vrot.slane %v320, 1
  %v322 = vadd.f32 %v320, %v321
  %v323 = vsel %vm98, %v45, 0.0
  %v324 = vrot.slane %v323, 4
  %v325 = vadd.f32 %v323, %v324
  %v326 = vrot.slane %v325, 2
  %v327 = vadd.f32 %v325, %v326
  %v328 = vrot.slane %v327, 1
  %v329 = vadd.f32 %v327, %v328
  %v330 = vsel %vm98, %v79, 0.0
  %v331 = vrot.slane %v330, 4
  %v332 = vadd.f32 %v330, %v331
  %v333 = vrot.slane %v332, 2
  %v334 = vadd.f32 %v332, %v333
  %v335 = vrot.slane %v334, 1
  %v336 = vadd.f32 %v334, %v335
  %v337 = vsel %vm98, %v46, 0.0
  %v338 = vrot.slane %v337, 4
  %v339 = vadd.f32 %v337, %v338
  %v340 = vrot.slane %v339, 2
  %v341 = vadd.f32 %v339, %v340
  %v342 = vrot.slane %v341, 1
  %v343 = vadd.f32 %v341, %v342
  %v344 = vsel %vm98, %v47, 0.0
  %v345 = vrot.slane %v344, 4
  %v346 = vadd.f32 %v344, %v345
  %v347 = vrot.slane %v346, 2
  %v348 = vadd.f32 %v346, %v347
  %v349 = vrot.slane %v348, 1
  %v350 = vadd.f32 %v348, %v349
  %v351 = vsel %vm98, %v80, 0.0
  %v352 = vrot.slane %v351, 4
  %v353 = vadd.f32 %v351, %v352
  %v354 = vrot.slane %v353, 2
  %v355 = vadd.f32 %v353, %v354
  %v356 = vrot.slane %v355, 1
  %v357 = vadd.f32 %v355, %v356
  %v358 = vsel %vm98, %v48, 0.0
  %v359 = vrot.slane %v358, 4
  %v360 = vadd.f32 %v358, %v359
  %v361 = vrot.slane %v360, 2
  %v362 = vadd.f32 %v360, %v361
  %v363 = vrot.slane %v362, 1
  %v364 = vadd.f32 %v362, %v363
  %v365 = vsel %vm98, %v81, 0.0
  %v366 = vrot.slane %v365, 4
  %v367 = vadd.f32 %v365, %v366
  %v368 = vrot.slane %v367, 2
  %v369 = vadd.f32 %v367, %v368
  %v370 = vrot.slane %v369, 1
  %v371 = vadd.f32 %v369, %v370
  %v372 = vsel %vm98, %v49, 0.0
  %v373 = vrot.slane %v372, 4
  %v374 = vadd.f32 %v372, %v373
  %v375 = vrot.slane %v374, 2
  %v376 = vadd.f32 %v374, %v375
  %v377 = vrot.slane %v376, 1
  %v378 = vadd.f32 %v376, %v377
  %v379 = vrcp.pop 4.0
  %v380 = vmul.f32 %v105, %v379
  %v381 = vmul.f32 %v112, %v379
  %v382 = vmul.f32 %v119, %v379
  %v383 = vmul.f32 %v126, %v379
  %v384 = vmul.f32 %v133, %v379
  %v385 = vmul.f32 %v140, %v379
  %v386 = vmul.f32 %v147, %v379
  %v387 = vmul.f32 %v154, %v379
  %v388 = vmul.f32 %v161, %v379
  %v389 = vmul.f32 %v168, %v379
  %v390 = vmul.f32 %v175, %v379
  %v391 = vmul.f32 %v182, %v379
  %v392 = vmul.f32 %v189, %v379
  %v393 = vmul.f32 %v196, %v379
  %v394 = vmul.f32 %v203, %v379
  %v395 = vmul.f32 %v210, %v379
  %v396 = vmul.f32 %v217, %v379
  %v397 = vmul.f32 %v224, %v379
  %v398 = vmul.f32 %v231, %v379
  %v399 = vmul.f32 %v238, %v379
  %v400 = vmul.f32 %v245, %v379
  %v401 = vmul.f32 %v252, %v379
  %v402 = vmul.f32 %v259, %v379
  %v403 = vmul.f32 %v266, %v379
  %v404 = vmul.f32 %v273, %v379
  %v405 = vmul.f32 %v280, %v379
  %v406 = vmul.f32 %v287, %v379
  %v407 = vmul.f32 %v294, %v379
  %v408 = vmul.f32 %v301, %v379
  %v409 = vmul.f32 %v308, %v379
  %v410 = vmul.f32 %v315, %v379
  %v411 = vmul.f32 %v322, %v379
  %v412 = vmul.f32 %v329, %v379
  %v413 = vmul.f32 %v336, %v379
  %v414 = vmul.f32 %v343, %v379
  %v415 = vmul.f32 %v350, %v379
  %v416 = vmul.f32 %v357, %v379
  %v417 = vmul.f32 %v364, %v379
  %v418 = vmul.f32 %v371, %v379
  %v419 = vmul.f32 %v378, %v379
  %v420 = vld [vmem:[%s1] sm:$0xff]
  %v421 = vld [vmem:[%s1 + $0x8] sm:$0xff]
  %v422 = vld [vmem:[%s1 + $0x10] sm:$0xff]
  %v423 = vld [vmem:[%s1 + $0x18] sm:$0xff]
  %v424 = vld [vmem:[%s1 + $0x20] sm:$0xff]
  %v425 = vld [vmem:[%s1 + $0x28] sm:$0xff]
  %v426 = vld [vmem:[%s1 + $0x30] sm:$0xff]
  %v427 = vld [vmem:[%s1 + $0x38] sm:$0xff]
  %v428 = vld [vmem:[%s1 + $0x40] sm:$0xff]
  %v429 = vld [vmem:[%s1 + $0x48] sm:$0xff]
  %v430 = vld [vmem:[%s1 + $0x50] sm:$0xff]
  %v431 = vld [vmem:[%s1 + $0x58] sm:$0xff]
  %v432 = vld [vmem:[%s1 + $0x60] sm:$0xff]
  %v433 = vld [vmem:[%s1 + $0x68] sm:$0xff]
  %v434 = vld [vmem:[%s1 + $0x70] sm:$0xff]
  %v435 = vld [vmem:[%s1 + $0x78] sm:$0xff]
  %v436 = vld [vmem:[%s1 + $0x80] sm:$0xff]
  %v437 = vld [vmem:[%s1 + $0x88] sm:$0xff]
  %v438 = vld [vmem:[%s1 + $0x90] sm:$0xff]
  %v439 = vld [vmem:[%s1 + $0x98] sm:$0xff]
  %v440 = vld [vmem:[%s1 + $0xa0] sm:$0xff]
  %v441 = vld [vmem:[%s1 + $0xa8] sm:$0xff]
  %v442 = vld [vmem:[%s1 + $0xb0] sm:$0xff]
  %v443 = vld [vmem:[%s1 + $0xb8] sm:$0xff]
  %v444 = vld [vmem:[%s1 + $0xc0] sm:$0xff]
  %v445 = vld [vmem:[%s1 + $0xc8] sm:$0xff]
  %v446 = vld [vmem:[%s1 + $0xd0] sm:$0xff]
  %v447 = vld [vmem:[%s1 + $0xd8] sm:$0xff]
  %v448 = vld [vmem:[%s1 + $0xe0] sm:$0xff]
  %v449 = vld [vmem:[%s1 + $0xe8] sm:$0xff]
  %v450 = vld [vmem:[%s1 + $0xf0] sm:$0xff]
  %v451 = vld [vmem:[%s1 + $0xf8] sm:$0xff]
  %v452 = vld [vmem:[%s1 + $0x100] sm:$0xff]
  %v453 = vld [vmem:[%s1 + $0x108] sm:$0xff]
  %v454 = vld [vmem:[%s1 + $0x110] sm:$0xff]
  %v455 = vld [vmem:[%s1 + $0x118] sm:$0xff]
  %v456 = vld [vmem:[%s1 + $0x120] sm:$0xff]
  %v457 = vld [vmem:[%s1 + $0x128] sm:$0xff]
  %v458 = vld [vmem:[%s1 + $0x130] sm:$0xff]
  %v459 = vld [vmem:[%s1 + $0x138] sm:$0xff]
  %v460 = vld [vmem:[%s1 + $0x140] sm:$0xff]
  %v461 = vld [vmem:[%s1 + $0x148] sm:$0xff]
  %v462 = vld [vmem:[%s1 + $0x150] sm:$0xff]
  %v463 = vld [vmem:[%s1 + $0x158] sm:$0xff]
  %v464 = vld [vmem:[%s1 + $0x160] sm:$0xff]
  %v465 = vld [vmem:[%s1 + $0x168] sm:$0xff]
  %v466 = vld [vmem:[%s1 + $0x170] sm:$0xff]
  %v467 = vld [vmem:[%s1 + $0x178] sm:$0xff]
  %v468 = vld [vmem:[%s1 + $0x180] sm:$0xff]
  %v469 = vld [vmem:[%s1 + $0x188] sm:$0xff]
  %v470 = vld [vmem:[%s1 + $0x190] sm:$0xff]
  %v471 = vld [vmem:[%s1 + $0x198] sm:$0xff]
  %v472 = vld [vmem:[%s1 + $0x1a0] sm:$0xff]
  %v473 = vld [vmem:[%s1 + $0x1a8] sm:$0xff]
  %v474 = vld [vmem:[%s1 + $0x1b0] sm:$0xff]
  %v475 = vld [vmem:[%s1 + $0x1b8] sm:$0xff]
  %v476 = vld [vmem:[%s1 + $0x1c0] sm:$0xff]
  %v477 = vld [vmem:[%s1 + $0x1c8] sm:$0xff]
  %v478 = vld [vmem:[%s1 + $0x1d0] sm:$0xff]
  %v479 = vld [vmem:[%s1 + $0x1d8] sm:$0xff]
  %v480 = vld [vmem:[%s1 + $0x1e0] sm:$0xff]
  %v481 = vld [vmem:[%s1 + $0x1e8] sm:$0xff]
  %v482 = vld [vmem:[%s1 + $0x1f0] sm:$0xff]
  %v483 = vld [vmem:[%s1 + $0x1f8] sm:$0xff]
  %v484 = vld [vmem:[%s1 + $0x200] sm:$0xff]
  %v485 = vld [vmem:[%s1 + $0x208] sm:$0xff]
  %v486 = vld [vmem:[%s1 + $0x210] sm:$0xff]
  %v487 = vld [vmem:[%s1 + $0x218] sm:$0xff]
  %v488 = vld [vmem:[%s1 + $0x220] sm:$0xff]
  %v489 = vld [vmem:[%s1 + $0x228] sm:$0xff]
  %v490 = vld [vmem:[%s1 + $0x230] sm:$0xff]
  %v491 = vld [vmem:[%s1 + $0x238] sm:$0xff]
  %v492 = vld [vmem:[%s1 + $0x240] sm:$0xff]
  %v493 = vld [vmem:[%s1 + $0x248] sm:$0xff]
  %v494 = vld [vmem:[%s1 + $0x250] sm:$0xff]
  %v495 = vld [vmem:[%s1 + $0x258] sm:$0xff]
  %v496 = vld [vmem:[%s1 + $0x260] sm:$0xff]
  %v497 = vld [vmem:[%s1 + $0x268] sm:$0xff]
  %v498 = vld [vmem:[%s1 + $0x270] sm:$0xff]
  %v499 = vld [vmem:[%s1 + $0x278] sm:$0xff]
  %v500 = vld [vmem:[%s1 + $0x280] sm:$0xff]
  %v501 = vld [vmem:[%s1 + $0x288] sm:$0xff]
  %v502 = vld [vmem:[%s1 + $0x290] sm:$0xff]
  %v503 = vld [vmem:[%s1 + $0x298] sm:$0xff]
  %v504 = vld [vmem:[%s1 + $0x2a0] sm:$0xff]
  %v505 = vld [vmem:[%s1 + $0x2a8] sm:$0xff]
  %v506 = vld [vmem:[%s1 + $0x2b0] sm:$0xff]
  %v507 = vld [vmem:[%s1 + $0x2b8] sm:$0xff]
  %v508 = vld [vmem:[%s1 + $0x2c0] sm:$0xff]
  %v509 = vld [vmem:[%s1 + $0x2c8] sm:$0xff]
  %v510 = vld [vmem:[%s1 + $0x2d0] sm:$0xff]
  %v511 = vld [vmem:[%s1 + $0x2d8] sm:$0xff]
  %v512 = vld [vmem:[%s1 + $0x2e0] sm:$0xff]
  %v513 = vld [vmem:[%s1 + $0x2e8] sm:$0xff]
  %v514 = vld [vmem:[%s1 + $0x2f0] sm:$0xff]
  %v515 = vld [vmem:[%s1 + $0x2f8] sm:$0xff]
  %v516 = vld [vmem:[%s1 + $0x300] sm:$0xff]
  %v517 = vld [vmem:[%s1 + $0x308] sm:$0xff]
  %v518 = vld [vmem:[%s1 + $0x310] sm:$0xff]
  %v519 = vld [vmem:[%s1 + $0x318] sm:$0xff]
  %v520 = vld [vmem:[%s1 + $0x320] sm:$0xff]
  %v521 = vld [vmem:[%s1 + $0x328] sm:$0xff]
  %v522 = vld [vmem:[%s1 + $0x330] sm:$0xff]
  %v523 = vld [vmem:[%s1 + $0x338] sm:$0xff]
  %v524 = vld [vmem:[%s1 + $0x340] sm:$0xff]
  %v525 = vld [vmem:[%s1 + $0x348] sm:$0xff]
  %v526 = vld [vmem:[%s1 + $0x350] sm:$0xff]
  %v527 = vld [vmem:[%s1 + $0x358] sm:$0xff]
  %v528 = vld [vmem:[%s1 + $0x360] sm:$0xff]
  %v529 = vld [vmem:[%s1 + $0x368] sm:$0xff]
  %v530 = vld [vmem:[%s1 + $0x370] sm:$0xff]
  %v531 = vld [vmem:[%s1 + $0x378] sm:$0xff]
  %v532 = vld [vmem:[%s1 + $0x380] sm:$0xff]
  %v533 = vld [vmem:[%s1 + $0x388] sm:$0xff]
  %v534 = vld [vmem:[%s1 + $0x390] sm:$0xff]
  %v535 = vld [vmem:[%s1 + $0x398] sm:$0xff]
  %v536 = vld [vmem:[%s1 + $0x3a0] sm:$0xff]
  %v537 = vld [vmem:[%s1 + $0x3a8] sm:$0xff]
  %v538 = vld [vmem:[%s1 + $0x3b0] sm:$0xff]
  %v539 = vld [vmem:[%s1 + $0x3b8] sm:$0xff]
  %v540 = vld [vmem:[%s1 + $0x3c0] sm:$0xff]
  %v541 = vld [vmem:[%s1 + $0x3c8] sm:$0xff]
  %v542 = vld [vmem:[%s1 + $0x3d0] sm:$0xff]
  %v543 = vld [vmem:[%s1 + $0x3d8] sm:$0xff]
  %v544 = vld [vmem:[%s1 + $0x3e0] sm:$0xff]
  %v545 = vld [vmem:[%s1 + $0x3e8] sm:$0xff]
  %v546 = vld [vmem:[%s1 + $0x3f0] sm:$0xff]
  %v547 = vld [vmem:[%s1 + $0x3f8] sm:$0xff]
  %v548 = vld [vmem:[%s1 + $0x400] sm:$0xff]
  %v549 = vld [vmem:[%s1 + $0x408] sm:$0xff]
  %v550 = vld [vmem:[%s1 + $0x410] sm:$0xff]
  %v551 = vld [vmem:[%s1 + $0x418] sm:$0xff]
  %v552 = vld [vmem:[%s1 + $0x420] sm:$0xff]
  %v553 = vld [vmem:[%s1 + $0x428] sm:$0xff]
  %v554 = vld [vmem:[%s1 + $0x430] sm:$0xff]
  %v555 = vld [vmem:[%s1 + $0x438] sm:$0xff]
  %v556 = vld [vmem:[%s1 + $0x440] sm:$0xff]
  %v557 = vld [vmem:[%s1 + $0x448] sm:$0xff]
  %v558 = vld [vmem:[%s1 + $0x450] sm:$0xff]
  %v559 = vld [vmem:[%s1 + $0x458] sm:$0xff]
  %v560 = vld [vmem:[%s1 + $0x460] sm:$0xff]
  %v561 = vld [vmem:[%s1 + $0x468] sm:$0xff]
  %v562 = vld [vmem:[%s1 + $0x470] sm:$0xff]
  %v563 = vld [vmem:[%s1 + $0x478] sm:$0xff]
  %v564 = vld [vmem:[%s1 + $0x480] sm:$0xff]
  %v565 = vld [vmem:[%s1 + $0x488] sm:$0xff]
  %v566 = vld [vmem:[%s1 + $0x490] sm:$0xff]
  %v567 = vld [vmem:[%s1 + $0x498] sm:$0xff]
  %v568 = vld [vmem:[%s1 + $0x4a0] sm:$0xff]
  %v569 = vld [vmem:[%s1 + $0x4a8] sm:$0xff]
  %v570 = vld [vmem:[%s1 + $0x4b0] sm:$0xff]
  %v571 = vld [vmem:[%s1 + $0x4b8] sm:$0xff]
  %v572 = vld [vmem:[%s1 + $0x4c0] sm:$0xff]
  %v573 = vld [vmem:[%s1 + $0x4c8] sm:$0xff]
  %v574 = vld [vmem:[%s1 + $0x4d0] sm:$0xff]
  %v575 = vld [vmem:[%s1 + $0x4d8] sm:$0xff]
  %v576 = vld [vmem:[%s1 + $0x4e0] sm:$0xff]
  %v577 = vld [vmem:[%s1 + $0x4e8] sm:$0xff]
  %v578 = vld [vmem:[%s1 + $0x4f0] sm:$0xff]
  %v579 = vld [vmem:[%s1 + $0x4f8] sm:$0xff]
  %v580 = vld [vmem:[%s2] sm:$0x3]
  %v582 = vlaneseq
  %v583 = vshrl.u32 %v582, 7
  %v584 = vsub.s32 0, %v583
  %v585 = vrot.slane %v580, %v584
  %v586 = vlaneseq
  %v587 = vshrl.u32 %v586, 7
  %v588 = vsub.s32 1, %v587
  %v589 = vrot.slane %v580, %v588
  %vm632 = vcmask 1041409
  %v633 = vsel %vm632, %v385, %v380
  %vm634 = vcmask 1042434
  %v635 = vsel %vm634, %v390, %v633
  %vm636 = vcmask 1043459
  %v637 = vsel %vm636, %v395, %v635
  %vm638 = vcmask 1044484
  %v639 = vsel %vm638, %v400, %v637
  %vm640 = vcmask 1045509
  %v641 = vsel %vm640, %v405, %v639
  %vm642 = vcmask 1046534
  %v643 = vsel %vm642, %v410, %v641
  %vm644 = vcmask 1047559
  %v645 = vsel %vm644, %v415, %v643
  %v646 = vsel %vm632, %v386, %v381
  %v647 = vsel %vm634, %v391, %v646
  %v648 = vsel %vm636, %v396, %v647
  %v649 = vsel %vm638, %v401, %v648
  %v650 = vsel %vm640, %v406, %v649
  %v651 = vsel %vm642, %v411, %v650
  %v652 = vsel %vm644, %v416, %v651
  %v653 = vsel %vm632, %v387, %v382
  %v654 = vsel %vm634, %v392, %v653
  %v655 = vsel %vm636, %v397, %v654
  %v656 = vsel %vm638, %v402, %v655
  %v657 = vsel %vm640, %v407, %v656
  %v658 = vsel %vm642, %v412, %v657
  %v659 = vsel %vm644, %v417, %v658
  %v660 = vsel %vm632, %v388, %v383
  %v661 = vsel %vm634, %v393, %v660
  %v662 = vsel %vm636, %v398, %v661
  %v663 = vsel %vm638, %v403, %v662
  %v664 = vsel %vm640, %v408, %v663
  %v665 = vsel %vm642, %v413, %v664
  %v666 = vsel %vm644, %v418, %v665
  %v667 = vsel %vm632, %v389, %v384
  %v668 = vsel %vm634, %v394, %v667
  %v669 = vsel %vm636, %v399, %v668
  %v670 = vsel %vm638, %v404, %v669
  %v671 = vsel %vm640, %v409, %v670
  %v672 = vsel %vm642, %v414, %v671
  %v673 = vsel %vm644, %v419, %v672
  %679 = vmatprep.subr.mxu0 %v451
  %680 = vmatpush1.msra.mxu0 %v450
  %681 = vmatprep.subr.mxu0 %v449
  %682 = vmatpush1.msra.mxu0 %v448
  %683 = vmatprep.subr.mxu0 %v447
  %684 = vmatpush1.msra.mxu0 %v446
  %685 = vmatprep.subr.mxu0 %v445
  %686 = vmatpush1.msra.mxu0 %v444
  %687 = vmatprep.subr.mxu0 %v443
  %688 = vmatpush1.msra.mxu0 %v442
  %689 = vmatprep.subr.mxu0 %v441
  %690 = vmatpush1.msra.mxu0 %v440
  %691 = vmatprep.subr.mxu0 %v439
  %692 = vmatpush1.msra.mxu0 %v438
  %693 = vmatprep.subr.mxu0 %v437
  %694 = vmatpush1.msra.mxu0 %v436
  %695 = vmatprep.subr.mxu0 %v435
  %696 = vmatpush1.msra.mxu0 %v434
  %697 = vmatprep.subr.mxu0 %v433
  %698 = vmatpush1.msra.mxu0 %v432
  %699 = vmatprep.subr.mxu0 %v431
  %700 = vmatpush1.msra.mxu0 %v430
  %701 = vmatprep.subr.mxu0 %v429
  %702 = vmatpush1.msra.mxu0 %v428
  %703 = vmatprep.subr.mxu0 %v427
  %704 = vmatpush1.msra.mxu0 %v426
  %705 = vmatprep.subr.mxu0 %v425
  %706 = vmatpush1.msra.mxu0 %v424
  %707 = vmatprep.subr.mxu0 %v423
  %708 = vmatpush1.msra.mxu0 %v422
  %709 = vmatprep.subr.mxu0 %v421
  %710 = vmatpush1.msra.mxu0 %v420
  %711 = vmatprep.subr.mxu0 %v483
  %712 = vmatpush2.msra.mxu0 %v482
  %713 = vmatprep.subr.mxu0 %v481
  %714 = vmatpush2.msra.mxu0 %v480
  %715 = vmatprep.subr.mxu0 %v479
  %716 = vmatpush2.msra.mxu0 %v478
  %717 = vmatprep.subr.mxu0 %v477
  %718 = vmatpush2.msra.mxu0 %v476
  %719 = vmatprep.subr.mxu0 %v475
  %720 = vmatpush2.msra.mxu0 %v474
  %721 = vmatprep.subr.mxu0 %v473
  %722 = vmatpush2.msra.mxu0 %v472
  %723 = vmatprep.subr.mxu0 %v471
  %724 = vmatpush2.msra.mxu0 %v470
  %725 = vmatprep.subr.mxu0 %v469
  %726 = vmatpush2.msra.mxu0 %v468
  %727 = vmatprep.subr.mxu0 %v467
  %728 = vmatpush2.msra.mxu0 %v466
  %729 = vmatprep.subr.mxu0 %v465
  %730 = vmatpush2.msra.mxu0 %v464
  %731 = vmatprep.subr.mxu0 %v463
  %732 = vmatpush2.msra.mxu0 %v462
  %733 = vmatprep.subr.mxu0 %v461
  %734 = vmatpush2.msra.mxu0 %v460
  %735 = vmatprep.subr.mxu0 %v459
  %736 = vmatpush2.msra.mxu0 %v458
  %737 = vmatprep.subr.mxu0 %v457
  %738 = vmatpush2.msra.mxu0 %v456
  %739 = vmatprep.subr.mxu0 %v455
  %740 = vmatpush2.msra.mxu0 %v454
  %741 = vmatprep.subr.mxu0 %v453
  %742 = vmatpush2.msra.mxu0 %v452
  %743 = vmatprep.mubr.f32.mxu0 %v652
  %744 = vmatmul.mubr.f32.gmra.mxu0 %v645
  %v745 = vpop.f32.mrf.mxu0
  %v746 = vadd.f32 %v585, %v745
  %v747 = vpop.f32.mrf.mxu0
  %v748 = vadd.f32 %v589, %v747
  %749 = vdwg.mxu0
  %750 = vmatprep.subr.mxu0 %v515
  %751 = vmatpush1.msra.mxu0 %v514
  %752 = vmatprep.subr.mxu0 %v513
  %753 = vmatpush1.msra.mxu0 %v512
  %754 = vmatprep.subr.mxu0 %v511
  %755 = vmatpush1.msra.mxu0 %v510
  %756 = vmatprep.subr.mxu0 %v509
  %757 = vmatpush1.msra.mxu0 %v508
  %758 = vmatprep.subr.mxu0 %v507
  %759 = vmatpush1.msra.mxu0 %v506
  %760 = vmatprep.subr.mxu0 %v505
  %761 = vmatpush1.msra.mxu0 %v504
  %762 = vmatprep.subr.mxu0 %v503
  %763 = vmatpush1.msra.mxu0 %v502
  %764 = vmatprep.subr.mxu0 %v501
  %765 = vmatpush1.msra.mxu0 %v500
  %766 = vmatprep.subr.mxu0 %v499
  %767 = vmatpush1.msra.mxu0 %v498
  %768 = vmatprep.subr.mxu0 %v497
  %769 = vmatpush1.msra.mxu0 %v496
  %770 = vmatprep.subr.mxu0 %v495
  %771 = vmatpush1.msra.mxu0 %v494
  %772 = vmatprep.subr.mxu0 %v493
  %773 = vmatpush1.msra.mxu0 %v492
  %774 = vmatprep.subr.mxu0 %v491
  %775 = vmatpush1.msra.mxu0 %v490
  %776 = vmatprep.subr.mxu0 %v489
  %777 = vmatpush1.msra.mxu0 %v488
  %778 = vmatprep.subr.mxu0 %v487
  %779 = vmatpush1.msra.mxu0 %v486
  %780 = vmatprep.subr.mxu0 %v485
  %781 = vmatpush1.msra.mxu0 %v484
  %782 = vmatprep.subr.mxu0 %v547
  %783 = vmatpush2.msra.mxu0 %v546
  %784 = vmatprep.subr.mxu0 %v545
  %785 = vmatpush2.msra.mxu0 %v544
  %786 = vmatprep.subr.mxu0 %v543
  %787 = vmatpush2.msra.mxu0 %v542
  %788 = vmatprep.subr.mxu0 %v541
  %789 = vmatpush2.msra.mxu0 %v540
  %790 = vmatprep.subr.mxu0 %v539
  %791 = vmatpush2.msra.mxu0 %v538
  %792 = vmatprep.subr.mxu0 %v537
  %793 = vmatpush2.msra.mxu0 %v536
  %794 = vmatprep.subr.mxu0 %v535
  %795 = vmatpush2.msra.mxu0 %v534
  %796 = vmatprep.subr.mxu0 %v533
  %797 = vmatpush2.msra.mxu0 %v532
  %798 = vmatprep.subr.mxu0 %v531
  %799 = vmatpush2.msra.mxu0 %v530
  %800 = vmatprep.subr.mxu0 %v529
  %801 = vmatpush2.msra.mxu0 %v528
  %802 = vmatprep.subr.mxu0 %v527
  %803 = vmatpush2.msra.mxu0 %v526
  %804 = vmatprep.subr.mxu0 %v525
  %805 = vmatpush2.msra.mxu0 %v524
  %806 = vmatprep.subr.mxu0 %v523
  %807 = vmatpush2.msra.mxu0 %v522
  %808 = vmatprep.subr.mxu0 %v521
  %809 = vmatpush2.msra.mxu0 %v520
  %810 = vmatprep.subr.mxu0 %v519
  %811 = vmatpush2.msra.mxu0 %v518
  %812 = vmatprep.subr.mxu0 %v517
  %813 = vmatpush2.msra.mxu0 %v516
  %814 = vmatprep.mubr.f32.mxu0 %v666
  %815 = vmatmul.mubr.f32.gmra.mxu0 %v659
  %v816 = vpop.f32.mrf.mxu0
  %v817 = vadd.f32 %v746, %v816
  %v818 = vpop.f32.mrf.mxu0
  %v819 = vadd.f32 %v748, %v818
  %820 = vdwg.mxu0
  %821 = vmatprep.subr.mxu0 %v579
  %822 = vmatpush1.msra.mxu0 %v578
  %823 = vmatprep.subr.mxu0 %v577
  %824 = vmatpush1.msra.mxu0 %v576
  %825 = vmatprep.subr.mxu0 %v575
  %826 = vmatpush1.msra.mxu0 %v574
  %827 = vmatprep.subr.mxu0 %v573
  %828 = vmatpush1.msra.mxu0 %v572
  %829 = vmatprep.subr.mxu0 %v571
  %830 = vmatpush1.msra.mxu0 %v570
  %831 = vmatprep.subr.mxu0 %v569
  %832 = vmatpush1.msra.mxu0 %v568
  %833 = vmatprep.subr.mxu0 %v567
  %834 = vmatpush1.msra.mxu0 %v566
  %835 = vmatprep.subr.mxu0 %v565
  %836 = vmatpush1.msra.mxu0 %v564
  %837 = vmatprep.subr.mxu0 %v563
  %838 = vmatpush1.msra.mxu0 %v562
  %839 = vmatprep.subr.mxu0 %v561
  %840 = vmatpush1.msra.mxu0 %v560
  %841 = vmatprep.subr.mxu0 %v559
  %842 = vmatpush1.msra.mxu0 %v558
  %843 = vmatprep.subr.mxu0 %v557
  %844 = vmatpush1.msra.mxu0 %v556
  %845 = vmatprep.subr.mxu0 %v555
  %846 = vmatpush1.msra.mxu0 %v554
  %847 = vmatprep.subr.mxu0 %v553
  %848 = vmatpush1.msra.mxu0 %v552
  %849 = vmatprep.subr.mxu0 %v551
  %850 = vmatpush1.msra.mxu0 %v550
  %851 = vmatprep.subr.mxu0 %v549
  %852 = vmatpush1.msra.mxu0 %v548
  %853 = vmatprep.subr.mxu0 0.0
  %854 = vmatpush2.msra.mxu0 0.0
  %855 = vmatprep.subr.mxu0 0.0
  %856 = vmatpush2.msra.mxu0 0.0
  %857 = vmatprep.subr.mxu0 0.0
  %858 = vmatpush2.msra.mxu0 0.0
  %859 = vmatprep.subr.mxu0 0.0
  %860 = vmatpush2.msra.mxu0 0.0
  %861 = vmatprep.subr.mxu0 0.0
  %862 = vmatpush2.msra.mxu0 0.0
  %863 = vmatprep.subr.mxu0 0.0
  %864 = vmatpush2.msra.mxu0 0.0
  %865 = vmatprep.subr.mxu0 0.0
  %866 = vmatpush2.msra.mxu0 0.0
  %867 = vmatprep.subr.mxu0 0.0
  %868 = vmatpush2.msra.mxu0 0.0
  %869 = vmatprep.subr.mxu0 0.0
  %870 = vmatpush2.msra.mxu0 0.0
  %871 = vmatprep.subr.mxu0 0.0
  %872 = vmatpush2.msra.mxu0 0.0
  %873 = vmatprep.subr.mxu0 0.0
  %874 = vmatpush2.msra.mxu0 0.0
  %875 = vmatprep.subr.mxu0 0.0
  %876 = vmatpush2.msra.mxu0 0.0
  %877 = vmatprep.subr.mxu0 0.0
  %878 = vmatpush2.msra.mxu0 0.0
  %879 = vmatprep.subr.mxu0 0.0
  %880 = vmatpush2.msra.mxu0 0.0
  %881 = vmatprep.subr.mxu0 0.0
  %882 = vmatpush2.msra.mxu0 0.0
  %883 = vmatprep.subr.mxu0 0.0
  %884 = vmatpush2.msra.mxu0 0.0
  %885 = vmatprep.mubr.f32.mxu0 0.0
  %886 = vmatmul.mubr.f32.gmra.mxu0 %v673
  %v887 = vpop.f32.mrf.mxu0
  %v888 = vadd.f32 %v817, %v887
  %v889 = vpop.f32.mrf.mxu0
  %v890 = vadd.f32 %v819, %v889
  %891 = vdwg.mxu0
  %v892 = vld [vmem:[%s3] sm:$0xff]
  %v893 = vld [vmem:[%s3 + $0x8] sm:$0xff]
  %v894 = vld [vmem:[%s3 + $0x10] sm:$0xff]
  %v895 = vld [vmem:[%s3 + $0x18] sm:$0xff]
  %v896 = vld [vmem:[%s3 + $0x20] sm:$0xff]
  %v897 = vld [vmem:[%s3 + $0x28] sm:$0xff]
  %v898 = vld [vmem:[%s3 + $0x30] sm:$0xff]
  %v899 = vld [vmem:[%s3 + $0x38] sm:$0xff]
  %v900 = vld [vmem:[%s3 + $0x40] sm:$0xff]
  %v901 = vld [vmem:[%s3 + $0x48] sm:$0xff]
  %v902 = vld [vmem:[%s3 + $0x50] sm:$0xff]
  %v903 = vld [vmem:[%s3 + $0x58] sm:$0xff]
  %v904 = vld [vmem:[%s3 + $0x60] sm:$0xff]
  %v905 = vld [vmem:[%s3 + $0x68] sm:$0xff]
  %v906 = vld [vmem:[%s3 + $0x70] sm:$0xff]
  %v907 = vld [vmem:[%s3 + $0x78] sm:$0xff]
  %v908 = vld [vmem:[%s3 + $0x80] sm:$0xff]
  %v909 = vld [vmem:[%s3 + $0x88] sm:$0xff]
  %v910 = vld [vmem:[%s3 + $0x90] sm:$0xff]
  %v911 = vld [vmem:[%s3 + $0x98] sm:$0xff]
  %v912 = vld [vmem:[%s3 + $0xa0] sm:$0xff]
  %v913 = vld [vmem:[%s3 + $0xa8] sm:$0xff]
  %v914 = vld [vmem:[%s3 + $0xb0] sm:$0xff]
  %v915 = vld [vmem:[%s3 + $0xb8] sm:$0xff]
  %v916 = vld [vmem:[%s3 + $0xc0] sm:$0xff]
  %v917 = vld [vmem:[%s3 + $0xc8] sm:$0xff]
  %v918 = vld [vmem:[%s3 + $0xd0] sm:$0xff]
  %v919 = vld [vmem:[%s3 + $0xd8] sm:$0xff]
  %v920 = vld [vmem:[%s3 + $0xe0] sm:$0xff]
  %v921 = vld [vmem:[%s3 + $0xe8] sm:$0xff]
  %v922 = vld [vmem:[%s3 + $0xf0] sm:$0xff]
  %v923 = vld [vmem:[%s3 + $0xf8] sm:$0xff]
  %v924 = vld [vmem:[%s4] sm:$0x1]
  %v926 = vlaneseq
  %v927 = vshrl.u32 %v926, 7
  %v928 = vsub.s32 0, %v927
  %v929 = vrot.slane %v924, %v928
  %931 = vmatprep.subr.mxu0 0.0
  %932 = vmatpush1.msra.mxu0 %v907
  %933 = vmatprep.subr.mxu0 0.0
  %934 = vmatpush1.msra.mxu0 %v906
  %935 = vmatprep.subr.mxu0 0.0
  %936 = vmatpush1.msra.mxu0 %v905
  %937 = vmatprep.subr.mxu0 0.0
  %938 = vmatpush1.msra.mxu0 %v904
  %939 = vmatprep.subr.mxu0 0.0
  %940 = vmatpush1.msra.mxu0 %v903
  %941 = vmatprep.subr.mxu0 0.0
  %942 = vmatpush1.msra.mxu0 %v902
  %943 = vmatprep.subr.mxu0 0.0
  %944 = vmatpush1.msra.mxu0 %v901
  %945 = vmatprep.subr.mxu0 0.0
  %946 = vmatpush1.msra.mxu0 %v900
  %947 = vmatprep.subr.mxu0 0.0
  %948 = vmatpush1.msra.mxu0 %v899
  %949 = vmatprep.subr.mxu0 0.0
  %950 = vmatpush1.msra.mxu0 %v898
  %951 = vmatprep.subr.mxu0 0.0
  %952 = vmatpush1.msra.mxu0 %v897
  %953 = vmatprep.subr.mxu0 0.0
  %954 = vmatpush1.msra.mxu0 %v896
  %955 = vmatprep.subr.mxu0 0.0
  %956 = vmatpush1.msra.mxu0 %v895
  %957 = vmatprep.subr.mxu0 0.0
  %958 = vmatpush1.msra.mxu0 %v894
  %959 = vmatprep.subr.mxu0 0.0
  %960 = vmatpush1.msra.mxu0 %v893
  %961 = vmatprep.subr.mxu0 0.0
  %962 = vmatpush1.msra.mxu0 %v892
  %963 = vmatprep.subr.mxu0 0.0
  %964 = vmatpush2.msra.mxu0 %v923
  %965 = vmatprep.subr.mxu0 0.0
  %966 = vmatpush2.msra.mxu0 %v922
  %967 = vmatprep.subr.mxu0 0.0
  %968 = vmatpush2.msra.mxu0 %v921
  %969 = vmatprep.subr.mxu0 0.0
  %970 = vmatpush2.msra.mxu0 %v920
  %971 = vmatprep.subr.mxu0 0.0
  %972 = vmatpush2.msra.mxu0 %v919
  %973 = vmatprep.subr.mxu0 0.0
  %974 = vmatpush2.msra.mxu0 %v918
  %975 = vmatprep.subr.mxu0 0.0
  %976 = vmatpush2.msra.mxu0 %v917
  %977 = vmatprep.subr.mxu0 0.0
  %978 = vmatpush2.msra.mxu0 %v916
  %979 = vmatprep.subr.mxu0 0.0
  %980 = vmatpush2.msra.mxu0 %v915
  %981 = vmatprep.subr.mxu0 0.0
  %982 = vmatpush2.msra.mxu0 %v914
  %983 = vmatprep.subr.mxu0 0.0
  %984 = vmatpush2.msra.mxu0 %v913
  %985 = vmatprep.subr.mxu0 0.0
  %986 = vmatpush2.msra.mxu0 %v912
  %987 = vmatprep.subr.mxu0 0.0
  %988 = vmatpush2.msra.mxu0 %v911
  %989 = vmatprep.subr.mxu0 0.0
  %990 = vmatpush2.msra.mxu0 %v910
  %991 = vmatprep.subr.mxu0 0.0
  %992 = vmatpush2.msra.mxu0 %v909
  %993 = vmatprep.subr.mxu0 0.0
  %994 = vmatpush2.msra.mxu0 %v908
  %995 = vmatprep.mubr.f32.mxu0 %v890
  %996 = vmatmul.mubr.f32.gmra.mxu0 %v888
  %v997 = vpop.f32.mrf.mxu0
  %v998 = vadd.f32 %v929, %v997
  %v999 = vpop.f32.mrf.mxu0
  %1000 = vdwg.mxu0
  %v1001 = vmax.f32 %v998, 0.0
  %v1002 = vld [vmem:[%s5] sm:$0xff]
  %v1003 = vld [vmem:[%s5 + $0x8] sm:$0xff]
  %v1004 = vld [vmem:[%s5 + $0x10] sm:$0xff]
  %v1005 = vld [vmem:[%s5 + $0x18] sm:$0xff]
  %v1006 = vld [vmem:[%s5 + $0x20] sm:$0xff]
  %v1007 = vld [vmem:[%s5 + $0x28] sm:$0xff]
  %v1008 = vld [vmem:[%s5 + $0x30] sm:$0xff]
  %v1009 = vld [vmem:[%s5 + $0x38] sm:$0xff]
  %v1010 = vld [vmem:[%s5 + $0x40] sm:$0xff]
  %v1011 = vld [vmem:[%s5 + $0x48] sm:$0xff]
  %v1012 = vld [vmem:[%s5 + $0x50] sm:$0xff]
  %v1013 = vld [vmem:[%s5 + $0x58] sm:$0xff]
  %v1014 = vld [vmem:[%s5 + $0x60] sm:$0xff]
  %v1015 = vld [vmem:[%s5 + $0x68] sm:$0xff]
  %v1016 = vld [vmem:[%s5 + $0x70] sm:$0xff]
  %v1017 = vld [vmem:[%s5 + $0x78] sm:$0xff]
  %v1018 = vld [vmem:[%s6] sm:$0x1]
  %v1020 = vlaneseq
  %v1021 = vshrl.u32 %v1020, 7
  %v1022 = vsub.s32 0, %v1021
  %v1023 = vrot.slane %v1018, %v1022
  %1025 = vmatprep.subr.mxu0 0.0
  %1026 = vmatpush1.msra.mxu0 %v1017
  %1027 = vmatprep.subr.mxu0 0.0
  %1028 = vmatpush1.msra.mxu0 %v1016
  %1029 = vmatprep.subr.mxu0 0.0
  %1030 = vmatpush1.msra.mxu0 %v1015
  %1031 = vmatprep.subr.mxu0 0.0
  %1032 = vmatpush1.msra.mxu0 %v1014
  %1033 = vmatprep.subr.mxu0 0.0
  %1034 = vmatpush1.msra.mxu0 %v1013
  %1035 = vmatprep.subr.mxu0 0.0
  %1036 = vmatpush1.msra.mxu0 %v1012
  %1037 = vmatprep.subr.mxu0 0.0
  %1038 = vmatpush1.msra.mxu0 %v1011
  %1039 = vmatprep.subr.mxu0 0.0
  %1040 = vmatpush1.msra.mxu0 %v1010
  %1041 = vmatprep.subr.mxu0 0.0
  %1042 = vmatpush1.msra.mxu0 %v1009
  %1043 = vmatprep.subr.mxu0 0.0
  %1044 = vmatpush1.msra.mxu0 %v1008
  %1045 = vmatprep.subr.mxu0 0.0
  %1046 = vmatpush1.msra.mxu0 %v1007
  %1047 = vmatprep.subr.mxu0 0.0
  %1048 = vmatpush1.msra.mxu0 %v1006
  %1049 = vmatprep.subr.mxu0 0.0
  %1050 = vmatpush1.msra.mxu0 %v1005
  %1051 = vmatprep.subr.mxu0 0.0
  %1052 = vmatpush1.msra.mxu0 %v1004
  %1053 = vmatprep.subr.mxu0 0.0
  %1054 = vmatpush1.msra.mxu0 %v1003
  %1055 = vmatprep.subr.mxu0 0.0
  %1056 = vmatpush1.msra.mxu0 %v1002
  %1057 = vmatprep.subr.mxu0 0.0
  %1058 = vmatpush2.msra.mxu0 0.0
  %1059 = vmatprep.subr.mxu0 0.0
  %1060 = vmatpush2.msra.mxu0 0.0
  %1061 = vmatprep.subr.mxu0 0.0
  %1062 = vmatpush2.msra.mxu0 0.0
  %1063 = vmatprep.subr.mxu0 0.0
  %1064 = vmatpush2.msra.mxu0 0.0
  %1065 = vmatprep.subr.mxu0 0.0
  %1066 = vmatpush2.msra.mxu0 0.0
  %1067 = vmatprep.subr.mxu0 0.0
  %1068 = vmatpush2.msra.mxu0 0.0
  %1069 = vmatprep.subr.mxu0 0.0
  %1070 = vmatpush2.msra.mxu0 0.0
  %1071 = vmatprep.subr.mxu0 0.0
  %1072 = vmatpush2.msra.mxu0 0.0
  %1073 = vmatprep.subr.mxu0 0.0
  %1074 = vmatpush2.msra.mxu0 0.0
  %1075 = vmatprep.subr.mxu0 0.0
  %1076 = vmatpush2.msra.mxu0 0.0
  %1077 = vmatprep.subr.mxu0 0.0
  %1078 = vmatpush2.msra.mxu0 0.0
  %1079 = vmatprep.subr.mxu0 0.0
  %1080 = vmatpush2.msra.mxu0 0.0
  %1081 = vmatprep.subr.mxu0 0.0
  %1082 = vmatpush2.msra.mxu0 0.0
  %1083 = vmatprep.subr.mxu0 0.0
  %1084 = vmatpush2.msra.mxu0 0.0
  %1085 = vmatprep.subr.mxu0 0.0
  %1086 = vmatpush2.msra.mxu0 0.0
  %1087 = vmatprep.subr.mxu0 0.0
  %1088 = vmatpush2.msra.mxu0 0.0
  %1089 = vmatprep.mubr.f32.mxu0 0.0
  %1090 = vmatmul.mubr.f32.gmra.mxu0 %v1001
  %v1091 = vpop.f32.mrf.mxu0
  %v1092 = vadd.f32 %v1023, %v1091
  %v1093 = vpop.f32.mrf.mxu0
  %1094 = vdwg.mxu0
  %v1095 = vxor.u32 %v1092, 2147483648
  %v1096 = vmul.f32 %v1095, 1.442695
  %v1097 = vpow.pop %v1096
  %v1098 = vadd.f32 %v1097, 1.0
  %v1099 = vrcp.pop %v1098
  %v1100 = vmul.f32 1.0, %v1099
  %1101 = vst [vmem:[%s7] sm:$0xff] %v1100
  // Predicated region
  $region30: #{_lambda_.1} parent=0 // pred_check
    _
  $region31: #{_lambda_.1} parent=0 // pred_check_branch
    %1103 = sbr.rel (0) target = $region33
  $region32: #{_lambda_.1} parent=0 // pred_region
    _
  $region33: #{_lambda_.1} parent=0 // pred_fallthru
    _
  // Predicated region
  $region34: #{_lambda_.1} parent=0 // pred_check
    _
  $region35: #{_lambda_.1} parent=0 // pred_check_branch
    %1105 = sbr.rel (0) target = $region37
  $region36: #{_lambda_.1} parent=0 // pred_region
    _
  $region37: #{_lambda_.1} parent=0 // pred_fallthru
    _

</llo_original>
